<compile_context>
chip_gen: v5e
topology: v5e:2x2
jax: 0.10.0
libtpu: 0.0.40
codegen_flags: <defaults>
</compile_context>

<pallas_src>
import math
from functools import partial

import numpy as np
import jax
import jax.numpy as jnp
from jax.experimental import pallas as pl
from jax.experimental.pallas import tpu as pltpu


def _round_up(n, m):
    return ((n + m - 1) // m) * m


def _rnn2_kernel(vec_ref, wg_ref, wlin_ref, b_ref, out_ref):
    """One LSTM step + linear head, fully straight-line.

    vec_ref : (2, VW)      row0 = [x | h0 | 0 pad], row1 = [c0 | 0 pad]
    wg_ref  : (I + H, 4H)  stacked [W_ih^T ; W_hh^T], gate columns ordered (i, f, o, g)
    wlin_ref: (H, PW)      head weight (transposed), zero-padded columns to PW lanes
    b_ref   : (2, BW)      row0 = gate bias (reordered, padded), row1 = head bias (padded)
    out_ref : (3, PW)      row0 = head output, row1 = h_T (padded), row2 = c_T (padded)
    """
    K = wg_ref.shape[0]              # I + H
    H = wlin_ref.shape[0]
    PW = out_ref.shape[1]            # packed lane width (multiple of 128)

    vec = vec_ref[...]               # single load of the packed activation rows
    xh = vec[0:1, :K]                # (1, I + H)  lane offset 0 -> no rotation
    c0 = vec[1:2, :H]                # (1, H)      lane offset 0 -> no rotation

    b = b_ref[...]
    gates = (jnp.dot(xh, wg_ref[...], preferred_element_type=jnp.float32)
             + b[0:1, :4 * H])       # (1, 4H), gate order (i, f, o, g)

    sfo = jax.nn.sigmoid(gates[:, :3 * H])     # one EUP launch over i, f, o
    g_g = jnp.tanh(gates[:, 3 * H:4 * H])      # one EUP launch
    i_g = sfo[:, 0 * H:1 * H]
    f_g = sfo[:, 1 * H:2 * H]
    o_g = sfo[:, 2 * H:3 * H]

    c_new = f_g * c0 + i_g * g_g
    h_new = o_g * jnp.tanh(c_new)              # one EUP launch

    # Head matmul: padded weight/bias columns are zero, so this directly yields the
    # full PW-lane output row with zeros past `output_size`.
    head = (jnp.dot(h_new, wlin_ref[...], preferred_element_type=jnp.float32)
            + b[1:2, :PW])                     # (1, PW)

    zpad = jnp.zeros((1, PW - H), jnp.float32)
    h_row = jnp.concatenate([h_new, zpad], axis=1)     # lane offset 0 pieces only
    c_row = jnp.concatenate([c_new, zpad], axis=1)
    out_ref[...] = jnp.concatenate([head, h_row, c_row], axis=0)   # single lane-dense store


@partial(jax.jit, static_argnames=("out_size",))
def rnn2_forward(x, hidden, kparams, *, out_size):
    """x: (T, input_size) f32; hidden: (h0, c0) each (1, 1, H).

    Returns (out (1, output_size), (hT (1,1,H), cT (1,1,H))) matching RNN2.forward.
    """
    h0, c0 = hidden
    T, input_size = x.shape
    H = h0.shape[-1]
    K = input_size + H
    # PyTorch's output.view(1, -1) into Linear(hidden_size, ...) requires T == 1.
    assert T == 1, "RNN2.forward only supports seq_len == 1 (see output.view(1, -1))"

    PW = kparams["w_lin_pad"].shape[1]

    # Packed activation rows: row0 = [x | h0 | 0], row1 = [c0 | 0] -> one DMA, lane-dense.
    VW = _round_up(max(K, H), 128)
    row0 = jnp.concatenate(
        [x[0:1], h0.reshape(1, H), jnp.zeros((1, VW - K), jnp.float32)], axis=1)
    row1 = jnp.concatenate(
        [c0.reshape(1, H), jnp.zeros((1, VW - H), jnp.float32)], axis=1)
    vec_in = jnp.concatenate([row0, row1], axis=0)                     # (2, VW)

    vmem = pl.BlockSpec(memory_space=pltpu.MemorySpace.VMEM)
    packed = pl.pallas_call(
        _rnn2_kernel,
        out_shape=jax.ShapeDtypeStruct((3, PW), jnp.float32),
        in_specs=[vmem, vmem, vmem, vmem],
        out_specs=vmem,
    )(
        vec_in,                   # (2, VW)
        kparams["w_gates"],       # (I + H, 4H)
        kparams["w_lin_pad"],     # (H, PW)
        kparams["b_all"],         # (2, BW)
    )

    out = packed[0:1, :out_size]
    hT = packed[1, :H].reshape(1, 1, H)
    cT = packed[2, :H].reshape(1, 1, H)
    return out, (hT, cT)


def init_params(key, input_size, hidden_size, output_size):
    """PyTorch-style uniform(-1/sqrt(H), 1/sqrt(H)) init.

    Returns (raw, packed): raw weights in native PyTorch layout (for the reference),
    packed/fused/reordered/zero-padded weights for the kernel.
    """
    ks = jax.random.split(key, 6)
    bound = 1.0 / math.sqrt(hidden_size)
    u = lambda k, shape: jax.random.uniform(k, shape, jnp.float32, -bound, bound)
    raw = {
        "w_ih": u(ks[0], (4 * hidden_size, input_size)),    # rows: i, f, g, o (PyTorch order)
        "w_hh": u(ks[1], (4 * hidden_size, hidden_size)),
        "b_ih": u(ks[2], (4 * hidden_size,)),
        "b_hh": u(ks[3], (4 * hidden_size,)),
        "w_lin": u(ks[4], (output_size, hidden_size)),
        "b_lin": u(ks[5], (output_size,)),
    }

    H = hidden_size
    # Column permutation (i, f, g, o) -> (i, f, o, g): sigmoid covers one contiguous 3H slice.
    perm = np.concatenate(
        [np.arange(0, 2 * H), np.arange(3 * H, 4 * H), np.arange(2 * H, 3 * H)])
    w_ih_t = raw["w_ih"].T[:, perm]                          # (I, 4H)
    w_hh_t = raw["w_hh"].T[:, perm]                          # (H, 4H)
    b_gates = (raw["b_ih"] + raw["b_hh"])[perm]              # (4H,)

    # Lane-dense widths for the packed head / bias buffers.
    PW = _round_up(max(output_size, H), 128)                 # output slab lane width
    BW = max(_round_up(4 * H, 128), PW)                      # bias slab lane width

    w_lin_pad = jnp.concatenate(
        [raw["w_lin"].T, jnp.zeros((H, PW - output_size), jnp.float32)], axis=1)   # (H, PW)
    b0 = jnp.concatenate([b_gates, jnp.zeros((BW - 4 * H,), jnp.float32)])
    b1 = jnp.concatenate([raw["b_lin"], jnp.zeros((BW - output_size,), jnp.float32)])

    packed = {
        # Fused gate weight: single (I+H, 4H) matmul operand.
        "w_gates": jnp.concatenate([w_ih_t, w_hh_t], axis=0),
        # Head weight, transposed + zero-padded columns to PW lanes.
        "w_lin_pad": w_lin_pad,
        # Biases, one row each, padded to the same lane width: (2, BW).
        "b_all": jnp.stack([b0, b1], axis=0),
    }
    return raw, packed


def _reference_forward(x, hidden, raw):
    """Pure-JAX reference mirroring torch.nn.LSTM (+ Linear), native gate order."""
    h = hidden[0].reshape(1, -1)
    c = hidden[1].reshape(1, -1)
    H = h.shape[1]
    w_ih_t = raw["w_ih"].T
    w_hh_t = raw["w_hh"].T
    b = (raw["b_ih"] + raw["b_hh"]).reshape(1, -1)
    for t in range(x.shape[0]):
        gates = x[t:t + 1] @ w_ih_t + h @ w_hh_t + b
        i = jax.nn.sigmoid(gates[:, 0:H])
        f = jax.nn.sigmoid(gates[:, H:2 * H])
        g = jnp.tanh(gates[:, 2 * H:3 * H])
        o = jax.nn.sigmoid(gates[:, 3 * H:4 * H])
        c = f * c + i * g
        h = o * jnp.tanh(c)
    out = h @ raw["w_lin"].T + raw["b_lin"].reshape(1, -1)
    return out, h, c


if __name__ == "__main__":
    input_size, hidden_size, output_size = 16, 32, 16
    seq_len = 1   # forced by output.view(1, -1) feeding Linear(hidden_size, ...)

    key = jax.random.PRNGKey(0)
    k_param, k_x = jax.random.split(key)
    raw, kparams = init_params(k_param, input_size, hidden_size, output_size)

    x = jax.random.normal(k_x, (seq_len, input_size), jnp.float32)
    # initHidden(): zeros of shape (n_layers=1, 1, hidden_size)
    hidden = (jnp.zeros((1, 1, hidden_size), jnp.float32),
              jnp.zeros((1, 1, hidden_size), jnp.float32))

    out, (hT, cT) = rnn2_forward(x, hidden, kparams, out_size=output_size)
    jax.block_until_ready((out, hT, cT))

    ref_out, ref_h, ref_c = _reference_forward(x, hidden, raw)
    assert jnp.allclose(out, ref_out, atol=1e-5), "output mismatch vs reference"
    assert jnp.allclose(hT.reshape(1, -1), ref_h, atol=1e-5), "h_T mismatch vs reference"
    assert jnp.allclose(cT.reshape(1, -1), ref_c, atol=1e-5), "c_T mismatch vs reference"

    print("KERNEL_OK")
</pallas_src>

<mosaic_0001>
module attributes {stable_mosaic.version = 11 : i64} {
  func.func @_rnn2_kernel(%arg0: memref<2x128xf32, #tpu.memory_space<vmem>>, %arg1: memref<48x128xf32, #tpu.memory_space<vmem>>, %arg2: memref<32x128xf32, #tpu.memory_space<vmem>>, %arg3: memref<2x128xf32, #tpu.memory_space<vmem>>, %arg4: memref<3x128xf32, #tpu.memory_space<vmem>>) attributes {dimension_semantics = [], scalar_prefetch = 0 : i64, scratch_operands = 0 : i64, tpu.core_type = #tpu.core_type<tc>} {
    %c0 = arith.constant 0 : index
    %c0_0 = arith.constant 0 : index
    %0 = vector.load %arg0[%c0, %c0_0] : memref<2x128xf32, #tpu.memory_space<vmem>>, vector<2x128xf32>
    %1 = vector.extract_strided_slice %0 {offsets = [0, 0], sizes = [1, 48], strides = [1, 1]} : vector<2x128xf32> to vector<1x48xf32>
    %2 = vector.extract_strided_slice %0 {offsets = [1, 0], sizes = [1, 32], strides = [1, 1]} : vector<2x128xf32> to vector<1x32xf32>
    %c0_1 = arith.constant 0 : index
    %c0_2 = arith.constant 0 : index
    %3 = vector.load %arg3[%c0_1, %c0_2] : memref<2x128xf32, #tpu.memory_space<vmem>>, vector<2x128xf32>
    %c0_3 = arith.constant 0 : index
    %c0_4 = arith.constant 0 : index
    %4 = vector.load %arg1[%c0_3, %c0_4] : memref<48x128xf32, #tpu.memory_space<vmem>>, vector<48x128xf32>
    %cst = arith.constant dense<0.000000e+00> : vector<1x128xf32>
    %5 = tpu.matmul %1, %4, %cst {dimension_numbers = #tpu.dot_dimension_numbers<[1], [0], [0], [1], [0, 0, 1, 1], [], []>} : vector<1x48xf32>, vector<48x128xf32>, vector<1x128xf32> -> vector<1x128xf32>
    %6 = vector.extract_strided_slice %3 {offsets = [0, 0], sizes = [1, 128], strides = [1, 1]} : vector<2x128xf32> to vector<1x128xf32>
    %7 = arith.addf %5, %6 : vector<1x128xf32>
    %8 = vector.extract_strided_slice %7 {offsets = [0, 0], sizes = [1, 96], strides = [1, 1]} : vector<1x128xf32> to vector<1x96xf32>
    %9 = arith.negf %8 : vector<1x96xf32>
    %10 = math.exp %9 : vector<1x96xf32>
    %cst_5 = arith.constant 1.000000e+00 : f32
    %11 = vector.broadcast %cst_5 : f32 to vector<1x96xf32>
    %12 = arith.addf %11, %10 : vector<1x96xf32>
    %13 = arith.divf %11, %12 : vector<1x96xf32>
    %14 = vector.extract_strided_slice %7 {offsets = [0, 96], sizes = [1, 32], strides = [1, 1]} : vector<1x128xf32> to vector<1x32xf32>
    %15 = math.tanh %14 : vector<1x32xf32>
    %16 = vector.extract_strided_slice %13 {offsets = [0, 0], sizes = [1, 32], strides = [1, 1]} : vector<1x96xf32> to vector<1x32xf32>
    %17 = vector.extract_strided_slice %13 {offsets = [0, 32], sizes = [1, 32], strides = [1, 1]} : vector<1x96xf32> to vector<1x32xf32>
    %18 = vector.extract_strided_slice %13 {offsets = [0, 64], sizes = [1, 32], strides = [1, 1]} : vector<1x96xf32> to vector<1x32xf32>
    %19 = arith.mulf %17, %2 : vector<1x32xf32>
    %20 = arith.mulf %16, %15 : vector<1x32xf32>
    %21 = arith.addf %19, %20 : vector<1x32xf32>
    %22 = math.tanh %21 : vector<1x32xf32>
    %23 = arith.mulf %18, %22 : vector<1x32xf32>
    %c0_6 = arith.constant 0 : index
    %c0_7 = arith.constant 0 : index
    %24 = vector.load %arg2[%c0_6, %c0_7] : memref<32x128xf32, #tpu.memory_space<vmem>>, vector<32x128xf32>
    %cst_8 = arith.constant dense<0.000000e+00> : vector<1x128xf32>
    %25 = tpu.matmul %23, %24, %cst_8 {dimension_numbers = #tpu.dot_dimension_numbers<[1], [0], [0], [1], [0, 0, 1, 1], [], []>} : vector<1x32xf32>, vector<32x128xf32>, vector<1x128xf32> -> vector<1x128xf32>
    %26 = vector.extract_strided_slice %3 {offsets = [1, 0], sizes = [1, 128], strides = [1, 1]} : vector<2x128xf32> to vector<1x128xf32>
    %27 = arith.addf %25, %26 : vector<1x128xf32>
    %cst_9 = arith.constant 0.000000e+00 : f32
    %28 = vector.broadcast %cst_9 : f32 to vector<1x96xf32>
    %29 = tpu.concatenate %23, %28 in 1 : vector<1x32xf32>, vector<1x96xf32> -> vector<1x128xf32>
    %30 = tpu.concatenate %21, %28 in 1 : vector<1x32xf32>, vector<1x96xf32> -> vector<1x128xf32>
    %31 = tpu.concatenate %27, %29, %30 in 0 : vector<1x128xf32>, vector<1x128xf32>, vector<1x128xf32> -> vector<3x128xf32>
    %c0_10 = arith.constant 0 : index
    %c0_11 = arith.constant 0 : index
    %32 = vector.load %arg4[%c0_10, %c0_11] : memref<3x128xf32, #tpu.memory_space<vmem>>, vector<3x128xf32>
    tpu.vector_store %arg4[%c0_10, %c0_11], %31 {strides = array<i32>} : memref<3x128xf32, #tpu.memory_space<vmem>>, vector<3x128xf32>,
    return
  }
}

</mosaic_0001>

<llo_original>
// kernel: rnn2_forward.1
$region0: #{rnn2_forward.1}
  #allocation0 [shape = 'u32[]', space=smem, size = 0x4, offset = 0x4, fixed_abs, tag = 'smem constant byte address 0x4 - core index']
  #allocation1 [shape = 'u32[72,128]{1,0:T(1,128)}', space=vmem, size = 0x9000, scoped, tag = 'internal scratch']
  %s0 = inlined_call_operand.vmem [shape: f32[2,128], index: 0, kind: input, shape index: {}]
  %s1 = inlined_call_operand.hbm [shape: f32[48,128], index: 1, kind: input, shape index: {}]
  %s2 = inlined_call_operand.hbm [shape: f32[32,128], index: 2, kind: input, shape index: {}]
  %s3 = inlined_call_operand.vmem [shape: f32[2,128], index: 3, kind: input, shape index: {}]
  %s4 = inlined_call_operand.vmem [shape: f32[3,128], index: 4, kind: output, shape index: {}]
  %s5 = sld [smem:[#allocation0]]
  $region34: #{rnn2_forward.1} parent=0
    _
  %s7 = ssub.s32 1, %s5
  %s8 = scalar_select 0, %s7, %s5
  $region1: #{rnn2_forward.1} parent=0
    #allocation2 [shape = 'u8[24576]{0}', space=vmem, size = 0x6000, scoped, tag = 'input window, operand 1, single buffered']
    #allocation3 [shape = 's32[1]{0}', space=sflag, size = 0x4, scoped, tag = 'scoped memory for rnn2_forward.1']
    #allocation4 [shape = 'u8[16384]{0}', space=vmem, size = 0x4000, scoped, tag = 'input window, operand 2, single buffered']
    #allocation5 [shape = 's32[1]{0}', space=sflag, size = 0x4, scoped, tag = 'scoped memory for rnn2_forward.1']
    %9 = vsyncpa [#allocation3], 0
    %10 = vsyncpa [#allocation5], 0
    // Predicated region
    $region2: #{rnn2_forward.1} parent=1 // pred_check
      _
    $region3: #{rnn2_forward.1} parent=1 // pred_check_branch
      %12 = sbr.rel (0) target = $region5
    $region4: #{rnn2_forward.1} parent=1 // pred_region
      _
    $region5: #{rnn2_forward.1} parent=1 // pred_fallthru
      _
    // Predicated region
    $region6: #{rnn2_forward.1} parent=1 // pred_check
      _
    $region7: #{rnn2_forward.1} parent=1 // pred_check_branch
      %14 = sbr.rel (0) target = $region9
    $region8: #{rnn2_forward.1} parent=1 // pred_region
      %16 = vsyncadd [#allocation3], 0
      %s17 = sshll.u32 %s1, 4
      %s18 = int_to_ptr.hbm [resolvable:$true] %s17
      %s19 = sshll.u32 [#allocation2], 4
      %s20 = int_to_ptr.vmem [resolvable:$true] %s19
      %25 = dma.hbm_to_vmem [thread:$0]  %s18, 768, %s20, [#allocation3], 128, 128, 8
    $region9: #{rnn2_forward.1} parent=1 // pred_fallthru
      _
    // Predicated region
    $region10: #{rnn2_forward.1} parent=1 // pred_check
      _
    $region11: #{rnn2_forward.1} parent=1 // pred_check_branch
      %27 = sbr.rel (0) target = $region13
    $region12: #{rnn2_forward.1} parent=1 // pred_region
      %29 = vsyncadd [#allocation5], 0
      %s30 = sshll.u32 %s2, 4
      %s31 = int_to_ptr.hbm [resolvable:$true] %s30
      %s32 = sshll.u32 [#allocation4], 4
      %s33 = int_to_ptr.vmem [resolvable:$true] %s32
      %38 = dma.hbm_to_vmem [thread:$0]  %s31, 512, %s33, [#allocation5], 128, 128, 8
    $region13: #{rnn2_forward.1} parent=1 // pred_fallthru
      _
    // Predicated region
    $region14: #{rnn2_forward.1} parent=1 // pred_check
      _
    $region15: #{rnn2_forward.1} parent=1 // pred_check_branch
      %40 = sbr.rel (0) target = $region17
    $region16: #{rnn2_forward.1} parent=1 // pred_region
      _
    $region17: #{rnn2_forward.1} parent=1 // pred_fallthru
      _
    // Predicated region
    $region18: #{rnn2_forward.1} parent=1 // pred_check
      _
    $region19: #{rnn2_forward.1} parent=1 // pred_check_branch
      %42 = sbr.rel (0) target = $region21
    $region20: #{rnn2_forward.1} parent=1 // pred_region
      %44 = dma.done [#allocation3], 768
    $region21: #{rnn2_forward.1} parent=1 // pred_fallthru
      _
    // Predicated region
    $region22: #{rnn2_forward.1} parent=1 // pred_check
      _
    $region23: #{rnn2_forward.1} parent=1 // pred_check_branch
      %46 = sbr.rel (0) target = $region25
    $region24: #{rnn2_forward.1} parent=1 // pred_region
      %48 = dma.done [#allocation5], 512
    $region25: #{rnn2_forward.1} parent=1 // pred_fallthru
      _
    %v49 = vld [vmem:[%s0] sm:$0x3]
    %v50 = vld [vmem:[%s3] sm:$0x3]
    %v51 = vld [vmem:[#allocation2] sm:$0xff]
    %v52 = vld [vmem:[#allocation2 + $0x8] sm:$0xff]
    %v53 = vld [vmem:[#allocation2 + $0x10] sm:$0xff]
    %v54 = vld [vmem:[#allocation2 + $0x18] sm:$0xff]
    %v55 = vld [vmem:[#allocation2 + $0x20] sm:$0xff]
    %v56 = vld [vmem:[#allocation2 + $0x28] sm:$0xff]
    %vm57 = vcmask 392192
    %v59 = vsel %vm57, %v49, 0
    %61 = vmatpush.msra.mxu0 0.0
    %62 = vmatpush.msra.mxu0 0.0
    %63 = vmatpush.msra.mxu0 0.0
    %64 = vmatpush.msra.mxu0 0.0
    %65 = vmatpush.msra.mxu0 0.0
    %66 = vmatpush.msra.mxu0 0.0
    %67 = vmatpush.msra.mxu0 0.0
    %68 = vmatpush.msra.mxu0 0.0
    %69 = vmatpush.msra.mxu0 0.0
    %70 = vmatpush.msra.mxu0 0.0
    %71 = vmatpush.msra.mxu0 %v56
    %72 = vmatpush.msra.mxu0 %v55
    %73 = vmatpush.msra.mxu0 %v54
    %74 = vmatpush.msra.mxu0 %v53
    %75 = vmatpush.msra.mxu0 %v52
    %76 = vmatpush.msra.mxu0 %v51
    %77 = vmatmul.f32.gmra.mxu0 %v59
    %v78 = vpop.f32.mrf.mxu0
    %v79 = vadd.f32 %v50, %v78
    %80 = vdwg.mxu0
    %v81 = vxor.u32 %v79, 2147483648
    %v82 = vmul.f32 %v81, 1.442695
    %v83 = vpow.pop %v82
    %v84 = vadd.f32 %v83, 1.0
    %v85 = vrcp.pop %v84
    %v86 = vmul.f32 %v84, %v85
    %v87 = vsub.f32 1.0, %v86
    %v88 = vmul.f32 %v85, %v87
    %v89 = vadd.f32 %v85, %v88
    %vm90 = vweird.f32 %v84
    %vm91 = vweird.f32 %v85
    %vm92 = vmor %vm90, %vm91
    %v93 = vsel %vm92, %v85, %v89
    %v94 = vand.u32 2147483647, %v84
    %vm95 = vcmp.eq.f32.partialorder %v94, 8.507059e+37
    %v96 = vand.u32 %v84, 2147483648
    %v97 = vor.u32 1.1754944e-38, %v96
    %v98 = vsel %vm95, %v97, %v93
    %v99 = vmul.f32 1.0, %v98
    %v100 = vtanh.pop %v79
    %v101 = vrot.slane %v49, 1
    %102 = vrot.lane.b32.xlu0 %v101, 32
    %v103 = vpop.permute.xlu0 %102
    %v105 = vmul.f32 %v99, %v103
    %107 = vrot.lane.b32.xlu0 %v100, 32
    %v108 = vpop.permute.xlu0 %107
    %v110 = vmul.f32 %v99, %v108
    %112 = vrot.lane.b32.xlu0 %v110, 32
    %v113 = vpop.permute.xlu0 %112
    %v115 = vadd.f32 %v105, %v113
    %v116 = vtanh.pop %v115
    %118 = vrot.lane.b32.xlu0 %v116, 32
    %v119 = vpop.permute.xlu0 %118
    %v121 = vmul.f32 %v99, %v119
    %v122 = vld [vmem:[#allocation4] sm:$0xff]
    %v123 = vld [vmem:[#allocation4 + $0x8] sm:$0xff]
    %v124 = vld [vmem:[#allocation4 + $0x10] sm:$0xff]
    %v125 = vld [vmem:[#allocation4 + $0x18] sm:$0xff]
    %127 = vrot.lane.b32.xlu0 %v121, 64
    %v128 = vpop.permute.xlu0 %127
    %v130 = vrot.slane %v50, 1
    %vm132 = vcmask 261120
    %v133 = vsel %vm132, %v128, 0
    %135 = vmatpush.msra.mxu0 0.0
    %136 = vmatpush.msra.mxu0 0.0
    %137 = vmatpush.msra.mxu0 0.0
    %138 = vmatpush.msra.mxu0 0.0
    %139 = vmatpush.msra.mxu0 0.0
    %140 = vmatpush.msra.mxu0 0.0
    %141 = vmatpush.msra.mxu0 0.0
    %142 = vmatpush.msra.mxu0 0.0
    %143 = vmatpush.msra.mxu0 0.0
    %144 = vmatpush.msra.mxu0 0.0
    %145 = vmatpush.msra.mxu0 0.0
    %146 = vmatpush.msra.mxu0 0.0
    %147 = vmatpush.msra.mxu0 %v125
    %148 = vmatpush.msra.mxu0 %v124
    %149 = vmatpush.msra.mxu0 %v123
    %150 = vmatpush.msra.mxu0 %v122
    %151 = vmatmul.f32.gmra.mxu0 %v133
    %v152 = vpop.f32.mrf.mxu0
    %v153 = vadd.f32 %v130, %v152
    %154 = vdwg.mxu0
    %v156 = vsel %vm132, %v128, 0.0
    %158 = vrot.lane.b32.xlu0 %v115, 96
    %v159 = vpop.permute.xlu0 %158
    %v161 = vsel %vm132, %v159, 0.0
    %v163 = vrot.slane %v156, 7
    %v166 = vrot.slane %v161, 6
    %vm168 = vcmask 1040384
    %v169 = vsel %vm168, %v153, %v163
    %vm170 = vcmask 1041408
    %v171 = vsel %vm170, %v169, %v166
    %172 = vst [vmem:[%s4] sm:$0x7] %v171
    // Predicated region
    $region26: #{rnn2_forward.1} parent=1 // pred_check
      _
    $region27: #{rnn2_forward.1} parent=1 // pred_check_branch
      %174 = sbr.rel (0) target = $region29
    $region28: #{rnn2_forward.1} parent=1 // pred_region
      _
    $region29: #{rnn2_forward.1} parent=1 // pred_fallthru
      _
    // Predicated region
    $region30: #{rnn2_forward.1} parent=1 // pred_check
      _
    $region31: #{rnn2_forward.1} parent=1 // pred_check_branch
      %176 = sbr.rel (0) target = $region33
    $region32: #{rnn2_forward.1} parent=1 // pred_region
      _
    $region33: #{rnn2_forward.1} parent=1 // pred_fallthru
      _
    %177 = vsyncpa [#allocation3], 1
    %178 = vsyncpa [#allocation5], 1

</llo_original>
